<compile_context>
chip_gen: v6e
topology: v6e:2x2x1
jax: 0.10.0
libtpu: 0.0.40
codegen_flags: <defaults>
</compile_context>

<pallas_src>
import functools
import math

import jax
import jax.numpy as jnp
from jax import lax
from jax.experimental import pallas as pl
from jax.experimental.pallas import tpu as pltpu

_EPS = 1e-6  # torch.nn.PairwiseDistance default eps


def _cdiv(a, b):
    return -(-a // b)


def _round_up(x, m):
    return _cdiv(x, m) * m


def _distance_loss_kernel(pred_ref, target_ref, sum_ref, cnt_ref, *,
                          d, rows, bn, lanes_valid, tiles_per_core):
    """One (rows, bn) lane-dense tile of the natural row-major layout."""
    step = pl.program_id(1)

    # Zero this core's resident accumulators on the first step of the reduction axis.
    @pl.when(step == 0)
    def _init():
        sum_ref[...] = jnp.zeros_like(sum_ref)
        cnt_ref[...] = jnp.zeros_like(cnt_ref)

    pred = pred_ref[...].astype(jnp.float32)      # (rows, bn)
    tgt = target_ref[...].astype(jnp.float32)     # (rows, bn)

    # Per-coordinate validity from the target only (pred NaN/Inf still propagate like torch).
    valid = ((tgt >= 0.0) & (tgt <= 1.0)).astype(jnp.float32)   # {0,1}

    # PairwiseDistance: ||pred - target + eps||_2 over the d coordinates.
    diff = pred - tgt + _EPS
    sq = diff * diff

    # Coordinates of one keypoint occupy d consecutive lanes.  Combine them with XLU lane
    # rotations (roll by -c == roll by bn-c); lane k*d then holds the full keypoint values.
    ssq = sq
    vkp = valid
    for c in range(1, d):
        ssq = ssq + pltpu.roll(sq, shift=bn - c, axis=1)
        vkp = vkp * pltpu.roll(valid, shift=bn - c, axis=1)

    # Keypoint-representative lanes + ragged-edge (out-of-bounds) masking.
    lane = lax.broadcasted_iota(jnp.int32, (rows, bn), 1)
    tile_start = (pl.program_id(0) * tiles_per_core + step) * bn
    keep = (vkp > 0.0) & ((lane + tile_start) < lanes_valid)
    if d == 2:
        keep = keep & ((lane & 1) == 0)
    elif d > 2:
        keep = keep & ((lane % d) == 0)

    # where() blocks garbage/NaN from out-of-bounds lanes before it can poison the sums.
    dist = jnp.where(keep, jnp.sqrt(ssq), 0.0)
    ones = jnp.where(keep, 1.0, 0.0)

    # Lane-reduce each step's contribution (XLU) -> the resident accumulator is only (rows, 1).
    sum_ref[...] += jnp.sum(dist, axis=1, keepdims=True)
    cnt_ref[...] += jnp.sum(ones, axis=1, keepdims=True)


def _masked_sums(pred2, target2):
    """(sum of masked distances, valid count) for an (n, d) slab, computed in f32."""
    p = pred2.astype(jnp.float32)
    t = target2.astype(jnp.float32)
    m = jnp.all((t >= 0.0) & (t <= 1.0), axis=-1)
    dist = jnp.sqrt(jnp.sum((p - t + _EPS) ** 2, axis=-1))
    total = jnp.sum(jnp.where(m, dist, 0.0))
    count = jnp.sum(m.astype(jnp.float32))
    return total, count


def _distance_loss_ref(pred, target):
    """Pure-JAX reference mirroring the PyTorch forward (also the small-problem path)."""
    d = pred.shape[-1]
    total, count = _masked_sums(pred.reshape(-1, d), target.reshape(-1, d))
    return jnp.where(count > 0.0, total / jnp.maximum(count, 1.0), jnp.float32(-1.0))


def _default_num_core_splits():
    # 2 only on dual-TensorCore v7x; single-TC v5e/v6e get no benefit from the split.
    try:
        kind = jax.devices()[0].device_kind.lower()
    except Exception:
        return 1
    return 2 if ("v7" in kind or "tpu7" in kind) else 1


def _distance_loss_pallas(pred, target, *, max_lane_tile, num_core_splits):
    d = pred.shape[-1]
    n = pred.size // d                    # total keypoints

    itemsize = max(jnp.dtype(pred.dtype).itemsize, jnp.dtype(target.dtype).itemsize)
    rows = 16 if itemsize <= 2 else 8     # full-vreg sublane packing per dtype

    main_kp = (n // rows) * rows          # keypoints handled by the kernel
    lanes = (main_kp * d) // rows         # lanes per slab row; divisible by d by construction

    lane_align = (128 * d) // math.gcd(128, d)          # lcm(128, d)
    if main_kp == 0 or lanes < lane_align:
        return _distance_loss_ref(pred, target)         # too small for the tiled layout

    g = max(1, int(num_core_splits))
    max_lane_tile = max(lane_align, (int(max_lane_tile) // lane_align) * lane_align)
    bn = min(max_lane_tile, _round_up(_cdiv(lanes, g), lane_align))
    assert bn % 128 == 0 and bn % d == 0
    num_tiles = _cdiv(lanes, bn)
    g = min(g, num_tiles)
    tiles_per_core = _cdiv(num_tiles, g)
    last_tile = num_tiles - 1

    def slab(x):
        flat = x.reshape(-1)
        if main_kp * d != flat.shape[0]:
            # Ragged tail handled in plain JAX below; this prefix slice is a contiguous
            # linear copy at worst (no transpose / pad of the whole buffer).
            flat = flat[: main_kp * d]
        # Pure row-major reshape of the natural buffer: zero-copy (bitcast) in XLA, lane-dense.
        return flat.reshape(rows, lanes)

    def in_map(c, i):
        # Clamp so a (rare) overhanging step on the parallel axis re-reads the last real
        # tile; its contribution is masked to zero in-kernel via the global lane bound.
        return (0, jnp.minimum(c * tiles_per_core + i, last_tile))

    kernel = functools.partial(
        _distance_loss_kernel, d=d, rows=rows, bn=bn,
        lanes_valid=lanes, tiles_per_core=tiles_per_core)

    # Double-buffered input tiles + small accumulators + slack, capped for v7x's 64 MiB VMEM.
    in_tile_bytes = rows * bn * itemsize
    vmem_est = 2 * 2 * in_tile_bytes + 4 * 1024 * 1024
    vmem_limit = int(min(max(2 * vmem_est, 32 * 1024 * 1024), 96 * 1024 * 1024))

    sums, cnts = pl.pallas_call(
        kernel,
        grid=(g, tiles_per_core),
        in_specs=[
            pl.BlockSpec((rows, bn), in_map),
            pl.BlockSpec((rows, bn), in_map),
        ],
        out_specs=[
            pl.BlockSpec((None, rows, 1), lambda c, i: (c, 0, 0)),
            pl.BlockSpec((None, rows, 1), lambda c, i: (c, 0, 0)),
        ],
        out_shape=[
            jax.ShapeDtypeStruct((g, rows, 1), jnp.float32),
            jax.ShapeDtypeStruct((g, rows, 1), jnp.float32),
        ],
        compiler_params=pltpu.CompilerParams(
            dimension_semantics=("parallel", "arbitrary"),
            vmem_limit_bytes=vmem_limit,
        ),
    )(slab(pred), slab(target))

    total = jnp.sum(sums)
    count = jnp.sum(cnts)

    tail_kp = n - main_kp                 # <= rows - 1 keypoints, negligible
    if tail_kp > 0:
        t_total, t_count = _masked_sums(pred.reshape(-1, d)[main_kp:],
                                        target.reshape(-1, d)[main_kp:])
        total = total + t_total
        count = count + t_count

    # Data-dependent "if ~mask.any(): return -1.0" becomes a select on the reduced count.
    return jnp.where(count > 0.0, total / jnp.maximum(count, 1.0), jnp.float32(-1.0))


def distance_loss(pred, target, *, use_pallas=None, min_pallas_elements=16384,
                  max_lane_tile=131072, num_core_splits=None):
    """pred, target: float arrays of shape (..., D). Returns a scalar float32 loss."""
    assert pred.shape == target.shape, (pred.shape, target.shape)
    if pred.size == 0:
        return jnp.float32(-1.0)
    if use_pallas is None:
        # Tiny problems: pallas_call overhead dominates -> pure JAX path.
        use_pallas = pred.size >= min_pallas_elements
    if num_core_splits is None:
        num_core_splits = _default_num_core_splits()
    if not use_pallas:
        return _distance_loss_ref(pred, target)
    return _distance_loss_pallas(pred, target, max_lane_tile=max_lane_tile,
                                 num_core_splits=num_core_splits)


if __name__ == "__main__":
    key = jax.random.PRNGKey(0)
    k = jax.random.split(key, 6)

    def check(name, out, ref, atol=1e-5, rtol=5e-5):
        out = jax.block_until_ready(out)
        assert jnp.allclose(out, ref, atol=atol, rtol=rtol), (name, out, ref)

    # Small shape implied by the module: batch=2, 8 keypoints, 2 coordinates.
    B, K, D = 2, 8, 2
    pred_s = jax.random.uniform(k[0], (B, K, D), dtype=jnp.float32)
    target_s = jax.random.uniform(k[1], (B, K, D), dtype=jnp.float32, minval=-0.2, maxval=1.2)
    check("auto-small", distance_loss(pred_s, target_s), _distance_loss_ref(pred_s, target_s))

    # Kernel path with several lane tiles on the reduction axis.
    pred_m = jax.random.uniform(k[2], (4, 1024, D), dtype=jnp.float32)
    target_m = jax.random.uniform(k[3], (4, 1024, D), dtype=jnp.float32, minval=-0.2, maxval=1.2)
    ref_m = _distance_loss_ref(pred_m, target_m)
    check("kernel-f32",
          distance_loss(pred_m, target_m, use_pallas=True, max_lane_tile=256), ref_m)

    # Two-way core split (v7x-style "parallel" axis), deliberately small lane tile.
    check("kernel-split",
          distance_loss(pred_m, target_m, use_pallas=True, max_lane_tile=128,
                        num_core_splits=2), ref_m)

    # Ragged keypoint count: main slab + partial last lane tile + pure-JAX tail.
    pred_r = jax.random.uniform(k[4], (2, 501, D), dtype=jnp.float32)
    target_r = jax.random.uniform(k[5], (2, 501, D), dtype=jnp.float32, minval=-0.2, maxval=1.2)
    check("kernel-ragged",
          distance_loss(pred_r, target_r, use_pallas=True, max_lane_tile=128),
          _distance_loss_ref(pred_r, target_r))

    # Native bf16 inputs: 16-row slab, f32 math in-kernel.
    pred_bf = pred_m.astype(jnp.bfloat16)
    target_bf = target_m.astype(jnp.bfloat16)
    check("kernel-bf16",
          distance_loss(pred_bf, target_bf, use_pallas=True, max_lane_tile=128),
          _distance_loss_ref(pred_bf, target_bf), atol=1e-4, rtol=1e-4)

    # No valid keypoint -> -1.0 through the kernel.
    bad_target = jnp.full((4, 1024, D), 2.0, dtype=jnp.float32)
    check("kernel-empty",
          distance_loss(pred_m, bad_target, use_pallas=True, max_lane_tile=256),
          jnp.float32(-1.0))

    print("KERNEL_OK")
</pallas_src>

<mosaic_0001>
module attributes {stable_mosaic.version = 11 : i64} {
  func.func @_distance_loss_kernel(%arg0: i32, %arg1: i32, %arg2: memref<8x256xf32, #tpu.memory_space<vmem>>, %arg3: memref<8x256xf32, #tpu.memory_space<vmem>>, %arg4: memref<1x8x1xf32, #tpu.memory_space<vmem>>, %arg5: memref<1x8x1xf32, #tpu.memory_space<vmem>>) attributes {dimension_semantics = [#tpu.dimension_semantics<parallel>, #tpu.dimension_semantics<arbitrary>], iteration_bounds = array<i64: 1, 4>, scalar_prefetch = 0 : i64, scratch_operands = 0 : i64, tpu.core_type = #tpu.core_type<tc>, window_params = [{transform_indices = @transform_0, window_bounds = array<i64: 8, 256>}, {transform_indices = @transform_1, window_bounds = array<i64: 8, 256>}, {transform_indices = @transform_2, window_bounds = array<i64: 1, 8, 1>}, {transform_indices = @transform_3, window_bounds = array<i64: 1, 8, 1>}]} {
    %c0_i32 = arith.constant 0 : i32
    %0 = arith.cmpi eq, %arg1, %c0_i32 : i32
    %1 = arith.extui %0 : i1 to i32
    %c0_i32_0 = arith.constant 0 : i32
    %2 = arith.cmpi ne, %1, %c0_i32_0 : i32
    scf.if %2 {
      %cst_26 = arith.constant 0.000000e+00 : f32
      %58 = vector.broadcast %cst_26 : f32 to vector<8x1xf32>
      %c0_27 = arith.constant 0 : index
      %c0_28 = arith.constant 0 : index
      %c0_29 = arith.constant 0 : index
      %59 = vector.load %arg4[%c0_27, %c0_28, %c0_29] : memref<1x8x1xf32, #tpu.memory_space<vmem>>, vector<1x8x1xf32>
      %60 = vector.shape_cast %59 : vector<1x8x1xf32> to vector<8x1xf32>
      %61 = vector.shape_cast %58 : vector<8x1xf32> to vector<1x8x1xf32>
      tpu.vector_store %arg4[%c0_27, %c0_28, %c0_29], %61 {strides = array<i32>} : memref<1x8x1xf32, #tpu.memory_space<vmem>>, vector<1x8x1xf32>,
      %cst_30 = arith.constant 0.000000e+00 : f32
      %62 = vector.broadcast %cst_30 : f32 to vector<8x1xf32>
      %c0_31 = arith.constant 0 : index
      %c0_32 = arith.constant 0 : index
      %c0_33 = arith.constant 0 : index
      %63 = vector.load %arg5[%c0_31, %c0_32, %c0_33] : memref<1x8x1xf32, #tpu.memory_space<vmem>>, vector<1x8x1xf32>
      %64 = vector.shape_cast %63 : vector<1x8x1xf32> to vector<8x1xf32>
      %65 = vector.shape_cast %62 : vector<8x1xf32> to vector<1x8x1xf32>
      tpu.vector_store %arg5[%c0_31, %c0_32, %c0_33], %65 {strides = array<i32>} : memref<1x8x1xf32, #tpu.memory_space<vmem>>, vector<1x8x1xf32>,
    } else {
    }
    %c0 = arith.constant 0 : index
    %c0_1 = arith.constant 0 : index
    %3 = vector.load %arg2[%c0, %c0_1] : memref<8x256xf32, #tpu.memory_space<vmem>>, vector<8x256xf32>
    %c0_2 = arith.constant 0 : index
    %c0_3 = arith.constant 0 : index
    %4 = vector.load %arg3[%c0_2, %c0_3] : memref<8x256xf32, #tpu.memory_space<vmem>>, vector<8x256xf32>
    %cst = arith.constant 0.000000e+00 : f32
    %5 = vector.broadcast %cst : f32 to vector<8x256xf32>
    %6 = arith.cmpf oge, %4, %5 : vector<8x256xf32>
    %cst_4 = arith.constant 1.000000e+00 : f32
    %7 = vector.broadcast %cst_4 : f32 to vector<8x256xf32>
    %8 = arith.cmpf ole, %4, %7 : vector<8x256xf32>
    %9 = arith.andi %6, %8 : vector<8x256xi1>
    %10 = arith.extui %9 : vector<8x256xi1> to vector<8x256xi32>
    %11 = arith.sitofp %10 : vector<8x256xi32> to vector<8x256xf32>
    %12 = arith.subf %3, %4 : vector<8x256xf32>
    %cst_5 = arith.constant 9.99999997E-7 : f32
    %13 = vector.broadcast %cst_5 : f32 to vector<8x256xf32>
    %14 = arith.addf %12, %13 : vector<8x256xf32>
    %15 = arith.mulf %14, %14 : vector<8x256xf32>
    %c255_i32 = arith.constant 255 : i32
    %16 = tpu.dynamic_rotate %15 by %c255_i32 dim 1 : vector<8x256xf32>, i32 -> vector<8x256xf32>
    %17 = arith.addf %15, %16 : vector<8x256xf32>
    %c255_i32_6 = arith.constant 255 : i32
    %18 = tpu.dynamic_rotate %11 by %c255_i32_6 dim 1 : vector<8x256xf32>, i32 -> vector<8x256xf32>
    %19 = arith.mulf %11, %18 : vector<8x256xf32>
    %20 = tpu.iota {dimensions = array<i32: 1>} : vector<8x256xi32>
    %c4_i32 = arith.constant 4 : i32
    %21 = arith.muli %arg0, %c4_i32 : i32
    %22 = arith.addi %21, %arg1 : i32
    %c256_i32 = arith.constant 256 : i32
    %23 = arith.muli %22, %c256_i32 : i32
    %cst_7 = arith.constant 0.000000e+00 : f32
    %24 = vector.broadcast %cst_7 : f32 to vector<8x256xf32>
    %25 = arith.cmpf ogt, %19, %24 : vector<8x256xf32>
    %26 = vector.broadcast %23 : i32 to vector<8x256xi32>
    %27 = arith.addi %20, %26 : vector<8x256xi32>
    %c1024_i32 = arith.constant 1024 : i32
    %28 = vector.broadcast %c1024_i32 : i32 to vector<8x256xi32>
    %29 = arith.cmpi slt, %27, %28 : vector<8x256xi32>
    %30 = arith.andi %25, %29 : vector<8x256xi1>
    %c1_i32 = arith.constant 1 : i32
    %31 = vector.broadcast %c1_i32 : i32 to vector<8x256xi32>
    %32 = arith.andi %20, %31 : vector<8x256xi32>
    %c0_i32_8 = arith.constant 0 : i32
    %33 = vector.broadcast %c0_i32_8 : i32 to vector<8x256xi32>
    %34 = arith.cmpi eq, %32, %33 : vector<8x256xi32>
    %35 = arith.andi %30, %34 : vector<8x256xi1>
    %36 = math.sqrt %17 : vector<8x256xf32>
    %cst_9 = arith.constant 0.000000e+00 : f32
    %37 = vector.broadcast %cst_9 : f32 to vector<8x256xf32>
    %38 = arith.select %35, %36, %37 : vector<8x256xi1>, vector<8x256xf32>
    %cst_10 = arith.constant 1.000000e+00 : f32
    %cst_11 = arith.constant 0.000000e+00 : f32
    %39 = vector.broadcast %cst_10 : f32 to vector<8x256xf32>
    %40 = vector.broadcast %cst_11 : f32 to vector<8x256xf32>
    %41 = arith.select %35, %39, %40 : vector<8x256xi1>, vector<8x256xf32>
    %c0_12 = arith.constant 0 : index
    %c0_13 = arith.constant 0 : index
    %c0_14 = arith.constant 0 : index
    %42 = vector.load %arg4[%c0_12, %c0_13, %c0_14] : memref<1x8x1xf32, #tpu.memory_space<vmem>>, vector<1x8x1xf32>
    %43 = vector.shape_cast %42 : vector<1x8x1xf32> to vector<8x1xf32>
    %cst_15 = arith.constant dense<0.000000e+00> : vector<8xf32>
    %44 = vector.multi_reduction <add>, %38, %cst_15 [1] : vector<8x256xf32> to vector<8xf32>
    %45 = vector.shape_cast %44 : vector<8xf32> to vector<8x1xf32>
    %46 = arith.addf %43, %45 : vector<8x1xf32>
    %c0_16 = arith.constant 0 : index
    %c0_17 = arith.constant 0 : index
    %c0_18 = arith.constant 0 : index
    %47 = vector.load %arg4[%c0_16, %c0_17, %c0_18] : memref<1x8x1xf32, #tpu.memory_space<vmem>>, vector<1x8x1xf32>
    %48 = vector.shape_cast %47 : vector<1x8x1xf32> to vector<8x1xf32>
    %49 = vector.shape_cast %46 : vector<8x1xf32> to vector<1x8x1xf32>
    tpu.vector_store %arg4[%c0_16, %c0_17, %c0_18], %49 {strides = array<i32>} : memref<1x8x1xf32, #tpu.memory_space<vmem>>, vector<1x8x1xf32>,
    %c0_19 = arith.constant 0 : index
    %c0_20 = arith.constant 0 : index
    %c0_21 = arith.constant 0 : index
    %50 = vector.load %arg5[%c0_19, %c0_20, %c0_21] : memref<1x8x1xf32, #tpu.memory_space<vmem>>, vector<1x8x1xf32>
    %51 = vector.shape_cast %50 : vector<1x8x1xf32> to vector<8x1xf32>
    %cst_22 = arith.constant dense<0.000000e+00> : vector<8xf32>
    %52 = vector.multi_reduction <add>, %41, %cst_22 [1] : vector<8x256xf32> to vector<8xf32>
    %53 = vector.shape_cast %52 : vector<8xf32> to vector<8x1xf32>
    %54 = arith.addf %51, %53 : vector<8x1xf32>
    %c0_23 = arith.constant 0 : index
    %c0_24 = arith.constant 0 : index
    %c0_25 = arith.constant 0 : index
    %55 = vector.load %arg5[%c0_23, %c0_24, %c0_25] : memref<1x8x1xf32, #tpu.memory_space<vmem>>, vector<1x8x1xf32>
    %56 = vector.shape_cast %55 : vector<1x8x1xf32> to vector<8x1xf32>
    %57 = vector.shape_cast %54 : vector<8x1xf32> to vector<1x8x1xf32>
    tpu.vector_store %arg5[%c0_23, %c0_24, %c0_25], %57 {strides = array<i32>} : memref<1x8x1xf32, #tpu.memory_space<vmem>>, vector<1x8x1xf32>,
    return
  }
  func.func @transform_0(%arg0: i32, %arg1: i32) -> (i32, i32) {
    %c4_i32 = arith.constant 4 : i32
    %0 = arith.muli %arg0, %c4_i32 : i32
    %1 = arith.addi %0, %arg1 : i32
    %c3_i32 = arith.constant 3 : i32
    %2 = arith.minsi %1, %c3_i32 : i32
    %c0_i32 = arith.constant 0 : i32
    %c0_i32_0 = arith.constant 0 : i32
    return %c0_i32, %2 : i32, i32
  }
  func.func @transform_1(%arg0: i32, %arg1: i32) -> (i32, i32) {
    %c4_i32 = arith.constant 4 : i32
    %0 = arith.muli %arg0, %c4_i32 : i32
    %1 = arith.addi %0, %arg1 : i32
    %c3_i32 = arith.constant 3 : i32
    %2 = arith.minsi %1, %c3_i32 : i32
    %c0_i32 = arith.constant 0 : i32
    %c0_i32_0 = arith.constant 0 : i32
    return %c0_i32, %2 : i32, i32
  }
  func.func @transform_2(%arg0: i32, %arg1: i32) -> (i32, i32, i32) {
    %c0_i32 = arith.constant 0 : i32
    %c0_i32_0 = arith.constant 0 : i32
    %c0_i32_1 = arith.constant 0 : i32
    return %arg0, %c0_i32, %c0_i32_0 : i32, i32, i32
  }
  func.func @transform_3(%arg0: i32, %arg1: i32) -> (i32, i32, i32) {
    %c0_i32 = arith.constant 0 : i32
    %c0_i32_0 = arith.constant 0 : i32
    %c0_i32_1 = arith.constant 0 : i32
    return %arg0, %c0_i32, %c0_i32_0 : i32, i32, i32
  }
}

</mosaic_0001>

<llo_original>
// kernel: tpu_custom_call.1
$region0: #{tpu_custom_call.1}
  #allocation0 [shape = 'u32[]', space=smem, size = 0x4, offset = 0x4, fixed_abs, tag = 'smem constant byte address 0x4 - core index']
  #allocation1 [shape = 'u32[144,128]{1,0:T(1,128)}', space=vmem, size = 0x12000, scoped, tag = 'internal scratch']
  %s0 = inlined_call_operand.hbm [shape: f32[8,1024], index: 0, kind: input, shape index: {}]
  %s1 = inlined_call_operand.hbm [shape: f32[8,1024], index: 1, kind: input, shape index: {}]
  %s2 = inlined_call_operand.vmem [shape: f32[1,8,1], index: 2, kind: output, shape index: {0}]
  %s3 = inlined_call_operand.vmem [shape: f32[1,8,1], index: 3, kind: output, shape index: {1}]
  %4 = xla_tuple %s2, %s3
  %s5 = sld [smem:[#allocation0]]
  $region61: #{tpu_custom_call.1} parent=0
    _
  %s7 = ssub.s32 1, %s5
  %s8 = scalar_select 0, %s7, %s5
  $region1: #{tpu_custom_call.1} parent=0
    #allocation2 [shape = 'u8[16384]{0}', space=vmem, size = 0x4000, scoped, tag = 'input window, operand 0']
    #allocation3 [shape = 's32[2]{0}', space=sflag, size = 0x8, scoped, tag = 'scoped memory for tpu_custom_call.1']
    #allocation4 [shape = 'u8[16384]{0}', space=vmem, size = 0x4000, scoped, tag = 'input window, operand 1']
    #allocation5 [shape = 's32[2]{0}', space=sflag, size = 0x8, scoped, tag = 'scoped memory for tpu_custom_call.1']
    %9 = vsyncpa [#allocation3], 0
    %s10 = scalar_lea.sflag [#allocation3], 1
    %11 = vsyncpa %s10, 0
    %12 = vsyncpa [#allocation5], 0
    %s13 = scalar_lea.sflag [#allocation5], 1
    %14 = vsyncpa %s13, 0
    loop: start=0, step=1, limit=6
    $region2: #{tpu_custom_call.1} parent=1 // loop_pre_header
      _
    $region3: #{tpu_custom_call.1} parent=1 // loop_header
      %s16 = sphi 0, %s20
      %p17 = scmp.ge.s32.totalorder %s16, 6
      %s23 = sphi 0, %s35
      %s24 = sphi 0, %s31
      %s25 = sphi 0, %s23
      %s26 = sphi 0, %s24
      %s27 = sphi 0, %s25
      %s28 = sphi 0, %s26
      %s46 = sphi 0, %s48
      %s49 = sphi 0, %s46
      %s50 = sphi 0, %s49
      %s66 = sphi 0, %s50
      %s80 = sphi 0, %s82
      %s83 = sphi 0, %s80
      %s84 = sphi 0, %s83
      %s100 = sphi 0, %s84
      %s106 = sphi 0, %s108
      %s109 = sphi 0, %s106
      %s110 = sphi 0, %s109
      %s126 = sphi 0, %s110
      %s132 = sphi 0, %s134
      %s135 = sphi 0, %s132
      %s136 = sphi 0, %s135
      %s152 = sphi 0, %s136
    $region4: #{tpu_custom_call.1} parent=1 // loop_header_branch
      %19 = sbr.rel (%p17) target = $region8
    $region5: #{tpu_custom_call.1} parent=1 // loop_body
      %s21 = ssub.s32 %s16, 1
      %s22 = ssub.s32 %s16, 2
      %s29 = sadd.s32 1, %s24
      %p30 = scmp.ge.s32.totalorder %s29, 4
      %s31 = scalar_select %p30, 0, %s29
      %s32 = sadd.s32 1, %s23
      %s33 = scalar_select %p30, %s32, %s23
      %p34 = scmp.ge.s32.totalorder %s33, 1
      %s35 = scalar_select %p34, 0, %s33
      %s36 = smul.u32 %s23, 4
      %s37 = sadd.s32 %s36, %s24
      %p38 = scmp.lt.s32.totalorder %s37, 3
      %s39 = scalar_select %p38, %s37, 3
      %s40 = smul.u32 %s35, 4
      %s41 = sadd.s32 %s40, %s31
      %p42 = scmp.lt.s32.totalorder %s41, 3
      %s43 = scalar_select %p42, %s41, 3
      %s44 = ssub.s32 %s39, %s43
      %p45 = scmp.eq.s32.totalorder %s44, 0
      %s47 = sadd.s32 %s46, 1
      %s48 = scalar_select %p45, %s46, %s47
      %p51 = pneg %p45
      %p52 = scmp.eq.s32.totalorder %s16, 3
      %p53 = por %p51, %p52
      %p54 = scmp.ne.s32.totalorder %s46, %s49
      %p55 = scmp.eq.s32.totalorder %s16, 0
      %p56 = por %p54, %p55
      %p57 = scmp.ne.s32.totalorder %s46, %s49
      %p58 = scmp.eq.s32.totalorder %s21, 3
      %p59 = por %p57, %p58
      %p60 = scmp.ne.s32.totalorder %s49, %s50
      %p61 = scmp.eq.s32.totalorder %s21, 0
      %p62 = por %p60, %p61
      %p63 = scmp.ne.s32.totalorder %s49, %s50
      %p64 = scmp.eq.s32.totalorder %s22, 3
      %p65 = por %p63, %p64
      %p67 = scmp.ne.s32.totalorder %s50, %s66
      %p68 = scmp.eq.s32.totalorder %s22, 0
      %p69 = por %p67, %p68
      %s70 = smul.u32 %s23, 4
      %s71 = sadd.s32 %s70, %s24
      %p72 = scmp.lt.s32.totalorder %s71, 3
      %s73 = scalar_select %p72, %s71, 3
      %s74 = smul.u32 %s35, 4
      %s75 = sadd.s32 %s74, %s31
      %p76 = scmp.lt.s32.totalorder %s75, 3
      %s77 = scalar_select %p76, %s75, 3
      %s78 = ssub.s32 %s73, %s77
      %p79 = scmp.eq.s32.totalorder %s78, 0
      %s81 = sadd.s32 %s80, 1
      %s82 = scalar_select %p79, %s80, %s81
      %p85 = pneg %p79
      %p86 = scmp.eq.s32.totalorder %s16, 3
      %p87 = por %p85, %p86
      %p88 = scmp.ne.s32.totalorder %s80, %s83
      %p89 = scmp.eq.s32.totalorder %s16, 0
      %p90 = por %p88, %p89
      %p91 = scmp.ne.s32.totalorder %s80, %s83
      %p92 = scmp.eq.s32.totalorder %s21, 3
      %p93 = por %p91, %p92
      %p94 = scmp.ne.s32.totalorder %s83, %s84
      %p95 = scmp.eq.s32.totalorder %s21, 0
      %p96 = por %p94, %p95
      %p97 = scmp.ne.s32.totalorder %s83, %s84
      %p98 = scmp.eq.s32.totalorder %s22, 3
      %p99 = por %p97, %p98
      %p101 = scmp.ne.s32.totalorder %s84, %s100
      %p102 = scmp.eq.s32.totalorder %s22, 0
      %p103 = por %p101, %p102
      %s104 = ssub.s32 %s23, %s35
      %p105 = scmp.eq.s32.totalorder %s104, 0
      %s107 = sadd.s32 %s106, 1
      %s108 = scalar_select %p105, %s106, %s107
      %p111 = pneg %p105
      %p112 = scmp.eq.s32.totalorder %s16, 3
      %p113 = por %p111, %p112
      %p114 = scmp.ne.s32.totalorder %s106, %s109
      %p115 = scmp.eq.s32.totalorder %s16, 0
      %p116 = por %p114, %p115
      %p117 = scmp.ne.s32.totalorder %s106, %s109
      %p118 = scmp.eq.s32.totalorder %s21, 3
      %p119 = por %p117, %p118
      %p120 = scmp.ne.s32.totalorder %s109, %s110
      %p121 = scmp.eq.s32.totalorder %s21, 0
      %p122 = por %p120, %p121
      %p123 = scmp.ne.s32.totalorder %s109, %s110
      %p124 = scmp.eq.s32.totalorder %s22, 3
      %p125 = por %p123, %p124
      %p127 = scmp.ne.s32.totalorder %s110, %s126
      %p128 = scmp.eq.s32.totalorder %s22, 0
      %p129 = por %p127, %p128
      %s130 = ssub.s32 %s23, %s35
      %p131 = scmp.eq.s32.totalorder %s130, 0
      %s133 = sadd.s32 %s132, 1
      %s134 = scalar_select %p131, %s132, %s133
      %p137 = pneg %p131
      %p138 = scmp.eq.s32.totalorder %s16, 3
      %p139 = por %p137, %p138
      %p140 = scmp.ne.s32.totalorder %s132, %s135
      %p141 = scmp.eq.s32.totalorder %s16, 0
      %p142 = por %p140, %p141
      %p143 = scmp.ne.s32.totalorder %s132, %s135
      %p144 = scmp.eq.s32.totalorder %s21, 3
      %p145 = por %p143, %p144
      %p146 = scmp.ne.s32.totalorder %s135, %s136
      %p147 = scmp.eq.s32.totalorder %s21, 0
      %p148 = por %p146, %p147
      %p149 = scmp.ne.s32.totalorder %s135, %s136
      %p150 = scmp.eq.s32.totalorder %s22, 3
      %p151 = por %p149, %p150
      %p153 = scmp.ne.s32.totalorder %s136, %s152
      %p154 = scmp.eq.s32.totalorder %s22, 0
      %p155 = por %p153, %p154
      %p156 = scmp.le.s32.totalorder 1, %s16
      %p157 = scmp.lt.s32.totalorder %s16, 5
      %p158 = pnand %p156, %p157
      %p159 = pneg %p158
      // Predicated region
      $region9: #{tpu_custom_call.1} parent=5 // pred_check
        _
      $region10: #{tpu_custom_call.1} parent=5 // pred_check_branch
        %161 = sbr.rel (%p158) target = $region12
      $region11: #{tpu_custom_call.1} parent=5 // pred_region
        %s162 = ssub.s32 %s16, 1
      $region12: #{tpu_custom_call.1} parent=5 // pred_fallthru
        _
      %p163 = scmp.lt.s32.totalorder %s16, 4
      // Predicated region
      $region13: #{tpu_custom_call.1} parent=5 // pred_check
        %p164 = pneg %p163
      $region14: #{tpu_custom_call.1} parent=5 // pred_check_branch
        %166 = sbr.rel (%p164) target = $region16
      $region15: #{tpu_custom_call.1} parent=5 // pred_region
        // Predicated region
        $region17: #{tpu_custom_call.1} parent=15 // pred_check
          %p167 = pneg %p56
        $region18: #{tpu_custom_call.1} parent=15 // pred_check_branch
          %169 = sbr.rel (%p167) target = $region20
        $region19: #{tpu_custom_call.1} parent=15 // pred_region
          %s170 = sand.u32 %s46, 1
          %s171 = scalar_lea.sflag [#allocation3], %s170
          %s172 = sand.u32 %s46, 1
          %s173 = smul.addr %s172, 16
          %s174 = scalar_lea.vmem [#allocation2], %s173
          %s175 = smul.u32 %s23, 4
          %s176 = sadd.s32 %s175, %s24
          %p177 = scmp.lt.s32.totalorder %s176, 3
          %s178 = scalar_select %p177, %s176, 3
          %s179 = smul.u32 2, %s178
          %s181 = ssub.s32 256, 256
          %182 = vsyncadd %s171, %s181
          %s183 = smul.addr %s179, 128
          %s184 = scalar_lea.hbm %s0, %s183
          %s186 = sshll.u32 %s174, 4
          %s187 = int_to_ptr.vmem [resolvable:$true] %s186
          %189 = dma.hbm_to_vmem [thread:$0]  %s184, 256, %s187, %s171
        $region20: #{tpu_custom_call.1} parent=15 // pred_fallthru
          _
        // Predicated region
        $region21: #{tpu_custom_call.1} parent=15 // pred_check
          %p190 = pneg %p90
        $region22: #{tpu_custom_call.1} parent=15 // pred_check_branch
          %192 = sbr.rel (%p190) target = $region24
        $region23: #{tpu_custom_call.1} parent=15 // pred_region
          %s193 = sand.u32 %s80, 1
          %s194 = scalar_lea.sflag [#allocation5], %s193
          %s195 = sand.u32 %s80, 1
          %s196 = smul.addr %s195, 16
          %s197 = scalar_lea.vmem [#allocation4], %s196
          %s198 = smul.u32 %s23, 4
          %s199 = sadd.s32 %s198, %s24
          %p200 = scmp.lt.s32.totalorder %s199, 3
          %s201 = scalar_select %p200, %s199, 3
          %s202 = smul.u32 2, %s201
          %s204 = ssub.s32 256, 256
          %205 = vsyncadd %s194, %s204
          %s206 = smul.addr %s202, 128
          %s207 = scalar_lea.hbm %s1, %s206
          %s209 = sshll.u32 %s197, 4
          %s210 = int_to_ptr.vmem [resolvable:$true] %s209
          %212 = dma.hbm_to_vmem [thread:$0]  %s207, 256, %s210, %s194
        $region24: #{tpu_custom_call.1} parent=15 // pred_fallthru
          _
      $region16: #{tpu_custom_call.1} parent=5 // pred_fallthru
        _
      %p213 = scmp.le.s32.totalorder 1, %s16
      %p214 = scmp.lt.s32.totalorder %s16, 5
      %p215 = pnand %p213, %p214
      %p216 = pneg %p215
      // Predicated region
      $region25: #{tpu_custom_call.1} parent=5 // pred_check
        _
      $region26: #{tpu_custom_call.1} parent=5 // pred_check_branch
        %218 = sbr.rel (%p215) target = $region28
      $region27: #{tpu_custom_call.1} parent=5 // pred_region
        %s219 = ssub.s32 %s16, 1
        %s220 = sand.u32 %s49, 1
        %s221 = scalar_lea.sflag [#allocation3], %s220
        %s222 = sand.u32 %s49, 1
        %s223 = smul.addr %s222, 16
        %s224 = scalar_lea.vmem [#allocation2], %s223
        // Predicated region
        $region29: #{tpu_custom_call.1} parent=27 // pred_check
          %p225 = pneg %p62
        $region30: #{tpu_custom_call.1} parent=27 // pred_check_branch
          %227 = sbr.rel (%p225) target = $region32
        $region31: #{tpu_custom_call.1} parent=27 // pred_region
          %228 = dma.done %s221, 256
        $region32: #{tpu_custom_call.1} parent=27 // pred_fallthru
          _
        %s229 = sand.u32 %s83, 1
        %s230 = scalar_lea.sflag [#allocation5], %s229
        %s231 = sand.u32 %s83, 1
        %s232 = smul.addr %s231, 16
        %s233 = scalar_lea.vmem [#allocation4], %s232
        // Predicated region
        $region33: #{tpu_custom_call.1} parent=27 // pred_check
          %p234 = pneg %p96
        $region34: #{tpu_custom_call.1} parent=27 // pred_check_branch
          %236 = sbr.rel (%p234) target = $region36
        $region35: #{tpu_custom_call.1} parent=27 // pred_region
          %237 = dma.done %s230, 256
        $region36: #{tpu_custom_call.1} parent=27 // pred_fallthru
          _
        %s238 = sand.u32 %s49, 1
        %s239 = scalar_lea.sflag [#allocation3], %s238
        %s240 = sand.u32 %s49, 1
        %s241 = smul.addr %s240, 16
        %s242 = scalar_lea.vmem [#allocation2], %s241
        %p243 = pneg %p62
        %p244 = pneg %p59
        %s245 = sand.u32 %s83, 1
        %s246 = scalar_lea.sflag [#allocation5], %s245
        %s247 = sand.u32 %s83, 1
        %s248 = smul.addr %s247, 16
        %s249 = scalar_lea.vmem [#allocation4], %s248
        %p250 = pneg %p96
        %p251 = pneg %p93
        %p252 = pneg %p122
        %p253 = pneg %p119
        %p254 = scmp.lt.s32.totalorder %s25, 0
        %s255 = scalar_select %p254, %s25, 0
        %s256 = smul.addr %s255, 8
        %s257 = scalar_lea.vmem %s2, %s256
        %p258 = pneg %p148
        %p259 = pneg %p145
        %p260 = scmp.lt.s32.totalorder %s25, 0
        %s261 = scalar_select %p260, %s25, 0
        %s262 = smul.addr %s261, 8
        %s263 = scalar_lea.vmem %s3, %s262
        %s264 = smul.u32 %s25, 4
        %s265 = sadd.s32 %s264, %s26
        %p266 = scmp.lt.s32.totalorder %s265, 3
        %s267 = scalar_select %p266, %s265, 3
        %s268 = smul.u32 2, %s267
        %s269 = smul.u32 %s25, 4
        %s270 = sadd.s32 %s269, %s26
        %p271 = scmp.lt.s32.totalorder %s270, 3
        %s272 = scalar_select %p271, %s270, 3
        %s273 = smul.u32 2, %s272
        %p274 = scmp.lt.s32.totalorder %s25, 0
        %s275 = scalar_select %p274, %s25, 0
        %s276 = smul.addr %s275, 8
        %s277 = scalar_lea.vmem %s2, %s276
        %p278 = scmp.lt.s32.totalorder %s25, 0
        %s279 = scalar_select %p278, %s25, 0
        %s280 = smul.addr %s279, 8
        %s281 = scalar_lea.vmem %s3, %s280
        %p282 = scmp.eq.s32.totalorder %s26, 0
        // Predicated region
        $region37: #{tpu_custom_call.1} parent=27 // pred_check
          %p283 = pneg %p282
        $region38: #{tpu_custom_call.1} parent=27 // pred_check_branch
          %285 = sbr.rel (%p283) target = $region40
        $region39: #{tpu_custom_call.1} parent=27 // pred_region
          %vm286 = vcmask 7168
          %287 = vst.msk [vmem:[%s277] sm:$0xff] %vm286, 0.0
          %288 = vst.msk [vmem:[%s281] sm:$0xff] %vm286, 0.0
        $region40: #{tpu_custom_call.1} parent=27 // pred_fallthru
          _
        %v289 = vld [vmem:[%s224] sm:$0xff]
        %v290 = vld [vmem:[%s224 + $0x8] sm:$0xff]
        %v291 = vld [vmem:[%s233] sm:$0xff]
        %v292 = vld [vmem:[%s233 + $0x8] sm:$0xff]
        %vm293 = vcmp.ge.f32.partialorder %v291, 0.0
        %vm294 = vcmp.ge.f32.partialorder %v292, 0.0
        %vm295 = vcmp.le.f32.partialorder %v291, 1.0
        %vm296 = vcmp.le.f32.partialorder %v292, 1.0
        %vm297 = vmand %vm293, %vm295
        %vm298 = vmand %vm294, %vm296
        %v299 = vsel %vm297, 1, 0
        %v300 = vsel %vm298, 1, 0
        %v301 = vcvt.s32.f32 %v299
        %v302 = vcvt.s32.f32 %v300
        %v303 = vsub.f32 %v289, %v291
        %v304 = vsub.f32 %v290, %v292
        %v305 = vadd.f32 %v303, 1e-06
        %v306 = vadd.f32 %v304, 1e-06
        %v307 = vmul.f32 %v305, %v305
        %v308 = vmul.f32 %v306, %v306
        %309 = vrot.lane.b32.xlu0 %v307, 127
        %v310 = vpop.permute.xlu0 %309
        %311 = vrot.lane.b32.xlu0 %v308, 127
        %v312 = vpop.permute.xlu0 %311
        %v313 = vlaneseq
        %v314 = vand.u32 %v313, 127
        %vm315 = vcmp.lt.s32.totalorder %v314, 127
        %v316 = vsel %vm315, %v310, %v312
        %v317 = vsel %vm315, %v312, %v310
        %v318 = vadd.f32 %v307, %v316
        %v319 = vadd.f32 %v308, %v317
        %320 = vrot.lane.b32.xlu0 %v301, 127
        %v321 = vpop.permute.xlu0 %320
        %322 = vrot.lane.b32.xlu0 %v302, 127
        %v323 = vpop.permute.xlu0 %322
        %v324 = vsel %vm315, %v321, %v323
        %v325 = vsel %vm315, %v323, %v321
        %v326 = vmul.f32 %v301, %v324
        %v327 = vmul.f32 %v302, %v325
        %v328 = vadd.s32 %v314, 128
        %s329 = smul.u32 %s25, 4
        %s330 = sadd.s32 %s329, %s26
        %s331 = smul.u32 %s330, 256
        %vm332 = vcmp.gt.f32.partialorder %v326, 0.0
        %vm333 = vcmp.gt.f32.partialorder %v327, 0.0
        %v334 = vstv %s331
        %v335 = vadd.s32 %v314, %v334
        %v336 = vadd.s32 %v328, %v334
        %vm337 = vcmp.lt.s32.totalorder %v335, 1024
        %vm338 = vcmp.lt.s32.totalorder %v336, 1024
        %vm339 = vmand %vm332, %vm337
        %vm340 = vmand %vm333, %vm338
        %v341 = vand.u32 %v314, 1
        %v342 = vand.u32 %v328, 1
        %vm343 = vcmp.eq.s32.totalorder %v341, 0
        %vm344 = vcmp.eq.s32.totalorder %v342, 0
        %vm345 = vmand %vm339, %vm343
        %vm346 = vmand %vm340, %vm344
        %v347 = vrsqrt.pop %v318
        %v348 = vmul.f32 %v318, %v347
        %vm349 = vcmp.eq.f32.partialorder %v318, inf
        %v350 = vsel %vm349, %v318, %v348
        %vm351 = vcmp.eq.f32.partialorder %v318, 0.0
        %v352 = vand.u32 %v318, 2147483648
        %v353 = vsel %vm351, %v352, %v350
        %v354 = vrsqrt.pop %v319
        %v355 = vmul.f32 %v319, %v354
        %vm356 = vcmp.eq.f32.partialorder %v319, inf
        %v357 = vsel %vm356, %v319, %v355
        %vm358 = vcmp.eq.f32.partialorder %v319, 0.0
        %v359 = vand.u32 %v319, 2147483648
        %v360 = vsel %vm358, %v359, %v357
        %v361 = vsel %vm345, %v353, 0.0
        %v362 = vsel %vm346, %v360, 0.0
        %v363 = vsel %vm345, 1.0, 0.0
        %v364 = vsel %vm346, 1.0, 0.0
        %v365 = vld [vmem:[%s277] sm:$0xff]
        %v366 = vadd.f32 %v361, %v362
        %367 = vadd.xlane.f32.xlu0 %v366
        %v368 = vpop.xlane.xlu0 %367
        %v369 = vadd.f32 %v365, %v368
        %vm370 = vcmask 7168
        %371 = vst.msk [vmem:[%s277] sm:$0xff] %vm370, %v369
        %v372 = vld [vmem:[%s281] sm:$0xff]
        %v373 = vadd.f32 %v363, %v364
        %374 = vadd.xlane.f32.xlu0 %v373
        %v375 = vpop.xlane.xlu0 %374
        %v376 = vadd.f32 %v372, %v375
        %377 = vst.msk [vmem:[%s281] sm:$0xff] %vm370, %v376
        %p378 = scmp.lt.s32.totalorder %s25, 0
        %s379 = scalar_select %p378, %s25, 0
        %s380 = smul.addr %s379, 8
        %s381 = scalar_lea.vmem %s2, %s380
        %p382 = scmp.lt.s32.totalorder %s25, 0
        %s383 = scalar_select %p382, %s25, 0
        %s384 = smul.addr %s383, 8
        %s385 = scalar_lea.vmem %s3, %s384
        // Predicated region
        $region41: #{tpu_custom_call.1} parent=27 // pred_check
          %p386 = pneg %p119
        $region42: #{tpu_custom_call.1} parent=27 // pred_check_branch
          %388 = sbr.rel (%p386) target = $region44
        $region43: #{tpu_custom_call.1} parent=27 // pred_region
          _
        $region44: #{tpu_custom_call.1} parent=27 // pred_fallthru
          _
        // Predicated region
        $region45: #{tpu_custom_call.1} parent=27 // pred_check
          %p389 = pneg %p145
        $region46: #{tpu_custom_call.1} parent=27 // pred_check_branch
          %391 = sbr.rel (%p389) target = $region48
        $region47: #{tpu_custom_call.1} parent=27 // pred_region
          _
        $region48: #{tpu_custom_call.1} parent=27 // pred_fallthru
          _
        // Predicated region
        $region49: #{tpu_custom_call.1} parent=27 // pred_check
          %p392 = pneg %p119
        $region50: #{tpu_custom_call.1} parent=27 // pred_check_branch
          %394 = sbr.rel (%p392) target = $region52
        $region51: #{tpu_custom_call.1} parent=27 // pred_region
          %p395 = scmp.lt.s32.totalorder %s25, 0
          %s396 = scalar_select %p395, %s25, 0
          %s397 = smul.addr %s396, 8
          %s398 = scalar_lea.vmem %s2, %s397
        $region52: #{tpu_custom_call.1} parent=27 // pred_fallthru
          _
        // Predicated region
        $region53: #{tpu_custom_call.1} parent=27 // pred_check
          %p399 = pneg %p145
        $region54: #{tpu_custom_call.1} parent=27 // pred_check_branch
          %401 = sbr.rel (%p399) target = $region56
        $region55: #{tpu_custom_call.1} parent=27 // pred_region
          %p402 = scmp.lt.s32.totalorder %s25, 0
          %s403 = scalar_select %p402, %s25, 0
          %s404 = smul.addr %s403, 8
          %s405 = scalar_lea.vmem %s3, %s404
        $region56: #{tpu_custom_call.1} parent=27 // pred_fallthru
          _
      $region28: #{tpu_custom_call.1} parent=5 // pred_fallthru
        _
      %p406 = scmp.le.s32.totalorder 2, %s16
      // Predicated region
      $region57: #{tpu_custom_call.1} parent=5 // pred_check
        %p407 = pneg %p406
      $region58: #{tpu_custom_call.1} parent=5 // pred_check_branch
        %409 = sbr.rel (%p407) target = $region60
      $region59: #{tpu_custom_call.1} parent=5 // pred_region
        %s410 = ssub.s32 %s16, 2
      $region60: #{tpu_custom_call.1} parent=5 // pred_fallthru
        _
    $region6: #{tpu_custom_call.1} parent=1 // loop_footer
      %s20 = sadd.s32 1, %s16
    $region7: #{tpu_custom_call.1} parent=1 // loop_footer_branch
      %15 = sbr.rel target = $region3
    $region8: #{tpu_custom_call.1} parent=1 // loop_exit
      _
    %411 = vsyncpa [#allocation3], 1
    %s412 = scalar_lea.sflag [#allocation3], 1
    %413 = vsyncpa %s412, 1
    %414 = vsyncpa [#allocation5], 1
    %s415 = scalar_lea.sflag [#allocation5], 1
    %416 = vsyncpa %s415, 1

</llo_original>
